<compile_context>
chip_gen: v5e
topology: v5e:2x2
jax: 0.10.0
libtpu: 0.0.40
codegen_flags: <defaults>
</compile_context>

<pallas_src>
import jax
import jax.numpy as jnp
from jax import lax
from jax.experimental import pallas as pl
from jax.experimental.pallas import tpu as pltpu


def _round_up(x, m):
    return ((x + m - 1) // m) * m


def _pad2d(a, rows, cols):
    pr, pc = rows - a.shape[0], cols - a.shape[1]
    if pr == 0 and pc == 0:
        return a
    return jnp.pad(a, ((0, pr), (0, pc)))


def _linear_with_lora_kernel(x_ref, w_ref, b_ref, xa_ref, lb_ref, o_ref,
                             acc_ref):
    k = pl.program_id(2)
    nk = pl.num_programs(2)

    @pl.when(k == 0)
    def _init():
        acc_ref[...] = jnp.zeros_like(acc_ref)

    # Base linear: x @ W^T, with W kept in (out, in) layout -> contract dim 1
    # of both operands (no wrapper-side transpose of the big weight).
    acc_ref[...] += lax.dot_general(
        x_ref[...], w_ref[...],                       # (tm, tk) x (tn, tk)
        dimension_numbers=(((1,), (1,)), ((), ())),
        preferred_element_type=jnp.float32)           # -> (tm, tn)

    @pl.when(k == nk - 1)
    def _finalize():
        acc = acc_ref[...] + b_ref[...]               # bias broadcast (1, tn), f32
        xa = xa_ref[...]                              # (tm, r), alpha pre-folded, f32
        lb = lb_ref[...]                              # (r, tn), f32
        r = lb.shape[0]
        if r <= 8:
            # Tiny effective rank: r rank-1 broadcast-multiply-adds on the VPU
            # instead of an MXU dot whose K pads to 128/256.
            for c in range(r):
                acc = acc + xa[:, c:c + 1] * lb[c:c + 1, :]
        else:
            acc = acc + jnp.dot(xa, lb, preferred_element_type=jnp.float32)
        o_ref[...] = acc.astype(o_ref.dtype)


def _blk(dim, tile):
    """Pick (block_size, padded_dim): full-dim block for small dims (no pad),
    otherwise the lane/sublane-aligned tile with zero padding."""
    if dim <= tile:
        return dim, dim
    return tile, _round_up(dim, tile)


def linear_with_lora(x, w, b, lora_A, lora_B, *, lora_alpha,
                     tm=512, tn=512, tk=512, mxu_dtype=jnp.bfloat16):
    """x: (batch, in_f); w: (out_f, in_f) (PyTorch Linear layout); b: (out_f,);
    lora_A: (in_f, r); lora_B: (r, out_f).

    mxu_dtype: dtype fed to the MXU for x / W (default bf16, f32 accumulation).
    Pass None to keep the original operand dtype.
    NOTE: in a real training loop the padded / bf16-cast weight should be
    cached at parameter-setup time instead of recomputed per call.
    """
    batch, in_f = x.shape
    out_f, in_f_w = w.shape
    assert in_f_w == in_f
    r = lora_A.shape[1]
    assert lora_B.shape == (r, out_f)
    out_dtype = x.dtype

    # LoRA first contraction hoisted out of the kernel: a tiny (M,K)x(K,r)
    # matmul in full precision, with lora_alpha folded in.
    xa = jnp.dot(x, lora_A, preferred_element_type=jnp.float32)
    xa = (xa * jnp.float32(lora_alpha)).astype(jnp.float32)

    if mxu_dtype is not None:
        x_c = x.astype(mxu_dtype)
        w_c = w.astype(mxu_dtype)
    else:
        x_c, w_c = x, w

    # Tile selection: tm/tn/tk are multiples of 128 (and of the bf16 sublane
    # pack of 16); dims smaller than the tile use a full-dim block (legal
    # under the (8,128)-or-full-dim rule) so no zero padding is generated.
    tm_eff, m_p = _blk(batch, tm)
    tn_eff, n_p = _blk(out_f, tn)
    tk_eff, k_p = _blk(in_f, tk)

    x_p = _pad2d(x_c, m_p, k_p)
    w_p = _pad2d(w_c, n_p, k_p)                    # stays (out, in): no transpose
    b_p = _pad2d(b.reshape(1, out_f).astype(jnp.float32), 1, n_p)
    xa_p = _pad2d(xa, m_p, r)
    lb_p = _pad2d(lora_B.astype(jnp.float32), r, n_p)

    grid = (m_p // tm_eff, n_p // tn_eff, k_p // tk_eff)

    out_p = pl.pallas_call(
        _linear_with_lora_kernel,
        out_shape=jax.ShapeDtypeStruct((m_p, n_p), out_dtype),
        grid_spec=pltpu.PrefetchScalarGridSpec(
            num_scalar_prefetch=0,
            grid=grid,
            in_specs=[
                pl.BlockSpec((tm_eff, tk_eff), lambda i, j, k: (i, k)),  # x
                pl.BlockSpec((tn_eff, tk_eff), lambda i, j, k: (j, k)),  # W (out,in)
                pl.BlockSpec((1, tn_eff),      lambda i, j, k: (0, j)),  # bias
                pl.BlockSpec((tm_eff, r),      lambda i, j, k: (i, 0)),  # xa = alpha*(x@A)
                pl.BlockSpec((r, tn_eff),      lambda i, j, k: (0, j)),  # lora_B
            ],
            out_specs=pl.BlockSpec((tm_eff, tn_eff), lambda i, j, k: (i, j)),
            scratch_shapes=[
                pltpu.VMEM((tm_eff, tn_eff), jnp.float32),   # f32 accumulator
            ],
        ),
        compiler_params=pltpu.CompilerParams(
            dimension_semantics=("parallel", "parallel", "arbitrary")),
    )(x_p, w_p, b_p, xa_p, lb_p)

    return out_p[:batch, :out_f]


if __name__ == "__main__":
    # Small shapes consistent with the module: a Linear(in=32, out=32) wrapped
    # with a 2-task LoRA stack (each task contributes rank 1 => r_eff = 2).
    # TODO(synk): add_task / set_curr_task bookkeeping is host-side Python; the
    # kernel consumes the already-concatenated lora_A / lora_B.
    batch, in_f, out_f = 8, 32, 32
    num_tasks = 2                      # curr_task = 1 -> concat of 2 rank-1 factors
    lora_r_cfg = 8                     # config.lora.r (only sets the init std)
    lora_alpha = 16.0                  # config.lora.lora_alpha (applied as plain alpha)
    std_dev = 1.0 / float(jnp.sqrt(jnp.float32(lora_r_cfg)))

    key = jax.random.PRNGKey(0)
    k_x, k_w, k_b, k_a, k_lb = jax.random.split(key, 5)

    x = jax.random.normal(k_x, (batch, in_f), dtype=jnp.float32)
    w = jax.random.normal(k_w, (out_f, in_f), dtype=jnp.float32) * 0.1   # nn.Linear weight
    b = jax.random.normal(k_b, (out_f,), dtype=jnp.float32) * 0.1        # nn.Linear bias

    # LoRA stack after set_curr_task: A = concat of per-task (in_f, 1) cols,
    # B = concat of per-task (1, out_f) rows.
    lora_A = jax.random.normal(k_a, (in_f, num_tasks), dtype=jnp.float32) * std_dev
    # NOTE: the PyTorch module initializes lora_B to zeros; small random values
    # here so the LoRA path is actually exercised numerically.
    lora_B = jax.random.normal(k_lb, (num_tasks, out_f), dtype=jnp.float32) * 0.05

    # Pure-JAX reference.
    ref = x @ w.T + b + lora_alpha * ((x @ lora_A) @ lora_B)

    # 1) Full-precision MXU path: tight tolerance.
    out_fp = linear_with_lora(x, w, b, lora_A, lora_B,
                              lora_alpha=lora_alpha, mxu_dtype=None)
    out_fp = jax.block_until_ready(out_fp)
    assert out_fp.shape == ref.shape
    assert jnp.allclose(out_fp, ref, atol=1e-4, rtol=1e-4), "f32 path mismatch"

    # 2) Default perf path: bf16 operand stream, f32 accumulation.
    out_bf = linear_with_lora(x, w, b, lora_A, lora_B, lora_alpha=lora_alpha)
    out_bf = jax.block_until_ready(out_bf)
    assert out_bf.shape == ref.shape
    assert jnp.allclose(out_bf, ref, atol=5e-2, rtol=5e-2), "bf16 path mismatch"

    print("KERNEL_OK")
</pallas_src>

<mosaic_0001>
module attributes {stable_mosaic.version = 11 : i64} {
  func.func @_linear_with_lora_kernel(%arg0: i32, %arg1: i32, %arg2: i32, %arg3: memref<8x32xf32, #tpu.memory_space<vmem>>, %arg4: memref<32x32xf32, #tpu.memory_space<vmem>>, %arg5: memref<1x32xf32, #tpu.memory_space<vmem>>, %arg6: memref<8x2xf32, #tpu.memory_space<vmem>>, %arg7: memref<2x32xf32, #tpu.memory_space<vmem>>, %arg8: memref<8x32xf32, #tpu.memory_space<vmem>>, %arg9: memref<8x32xf32, #tpu.memory_space<vmem>>) attributes {dimension_semantics = [#tpu.dimension_semantics<parallel>, #tpu.dimension_semantics<parallel>, #tpu.dimension_semantics<arbitrary>], iteration_bounds = array<i64: 1, 1, 1>, scalar_prefetch = 0 : i64, scratch_operands = 1 : i64, tpu.core_type = #tpu.core_type<tc>, window_params = [{transform_indices = @transform_0, window_bounds = array<i64: 8, 32>}, {transform_indices = @transform_1, window_bounds = array<i64: 32, 32>}, {transform_indices = @transform_2, window_bounds = array<i64: 1, 32>}, {transform_indices = @transform_3, window_bounds = array<i64: 8, 2>}, {transform_indices = @transform_4, window_bounds = array<i64: 2, 32>}, {transform_indices = @transform_5, window_bounds = array<i64: 8, 32>}]} {
    %c0_i32 = arith.constant 0 : i32
    %0 = arith.cmpi eq, %arg2, %c0_i32 : i32
    %1 = arith.extui %0 : i1 to i32
    %c0_i32_0 = arith.constant 0 : i32
    %2 = arith.cmpi ne, %1, %c0_i32_0 : i32
    scf.if %2 {
      %cst_10 = arith.constant 0.000000e+00 : f32
      %12 = vector.broadcast %cst_10 : f32 to vector<8x32xf32>
      %c0_11 = arith.constant 0 : index
      %c0_12 = arith.constant 0 : index
      %13 = vector.load %arg9[%c0_11, %c0_12] : memref<8x32xf32, #tpu.memory_space<vmem>>, vector<8x32xf32>
      tpu.vector_store %arg9[%c0_11, %c0_12], %12 {strides = array<i32>} : memref<8x32xf32, #tpu.memory_space<vmem>>, vector<8x32xf32>,
    } else {
    }
    %c0 = arith.constant 0 : index
    %c0_1 = arith.constant 0 : index
    %3 = vector.load %arg9[%c0, %c0_1] : memref<8x32xf32, #tpu.memory_space<vmem>>, vector<8x32xf32>
    %c0_2 = arith.constant 0 : index
    %c0_3 = arith.constant 0 : index
    %4 = vector.load %arg3[%c0_2, %c0_3] : memref<8x32xf32, #tpu.memory_space<vmem>>, vector<8x32xf32>
    %c0_4 = arith.constant 0 : index
    %c0_5 = arith.constant 0 : index
    %5 = vector.load %arg4[%c0_4, %c0_5] : memref<32x32xf32, #tpu.memory_space<vmem>>, vector<32x32xf32>
    %cst = arith.constant dense<0.000000e+00> : vector<8x32xf32>
    %6 = tpu.matmul %4, %5, %cst {dimension_numbers = #tpu.dot_dimension_numbers<[1], [1], [0], [0], [0, 0, 1, 0], [], []>} : vector<8x32xf32>, vector<32x32xf32>, vector<8x32xf32> -> vector<8x32xf32>
    %7 = arith.addf %3, %6 : vector<8x32xf32>
    %c0_6 = arith.constant 0 : index
    %c0_7 = arith.constant 0 : index
    %8 = vector.load %arg9[%c0_6, %c0_7] : memref<8x32xf32, #tpu.memory_space<vmem>>, vector<8x32xf32>
    tpu.vector_store %arg9[%c0_6, %c0_7], %7 {strides = array<i32>} : memref<8x32xf32, #tpu.memory_space<vmem>>, vector<8x32xf32>,
    %c0_i32_8 = arith.constant 0 : i32
    %9 = arith.cmpi eq, %arg2, %c0_i32_8 : i32
    %10 = arith.extui %9 : i1 to i32
    %c0_i32_9 = arith.constant 0 : i32
    %11 = arith.cmpi ne, %10, %c0_i32_9 : i32
    scf.if %11 {
      %c0_10 = arith.constant 0 : index
      %c0_11 = arith.constant 0 : index
      %12 = vector.load %arg9[%c0_10, %c0_11] : memref<8x32xf32, #tpu.memory_space<vmem>>, vector<8x32xf32>
      %c0_12 = arith.constant 0 : index
      %c0_13 = arith.constant 0 : index
      %13 = vector.load %arg5[%c0_12, %c0_13] : memref<1x32xf32, #tpu.memory_space<vmem>>, vector<1x32xf32>
      %14 = vector.broadcast %13 : vector<1x32xf32> to vector<8x32xf32>
      %15 = arith.addf %12, %14 : vector<8x32xf32>
      %c0_14 = arith.constant 0 : index
      %c0_15 = arith.constant 0 : index
      %16 = vector.load %arg6[%c0_14, %c0_15] : memref<8x2xf32, #tpu.memory_space<vmem>>, vector<8x2xf32>
      %c0_16 = arith.constant 0 : index
      %c0_17 = arith.constant 0 : index
      %17 = vector.load %arg7[%c0_16, %c0_17] : memref<2x32xf32, #tpu.memory_space<vmem>>, vector<2x32xf32>
      %18 = vector.extract_strided_slice %16 {offsets = [0, 0], sizes = [8, 1], strides = [1, 1]} : vector<8x2xf32> to vector<8x1xf32>
      %19 = vector.extract_strided_slice %17 {offsets = [0, 0], sizes = [1, 32], strides = [1, 1]} : vector<2x32xf32> to vector<1x32xf32>
      %20 = vector.broadcast %18 : vector<8x1xf32> to vector<8x32xf32>
      %21 = vector.broadcast %19 : vector<1x32xf32> to vector<8x32xf32>
      %22 = arith.mulf %20, %21 : vector<8x32xf32>
      %23 = arith.addf %15, %22 : vector<8x32xf32>
      %24 = vector.extract_strided_slice %16 {offsets = [0, 1], sizes = [8, 1], strides = [1, 1]} : vector<8x2xf32> to vector<8x1xf32>
      %25 = vector.extract_strided_slice %17 {offsets = [1, 0], sizes = [1, 32], strides = [1, 1]} : vector<2x32xf32> to vector<1x32xf32>
      %26 = vector.broadcast %24 : vector<8x1xf32> to vector<8x32xf32>
      %27 = vector.broadcast %25 : vector<1x32xf32> to vector<8x32xf32>
      %28 = arith.mulf %26, %27 : vector<8x32xf32>
      %29 = arith.addf %23, %28 : vector<8x32xf32>
      %c0_18 = arith.constant 0 : index
      %c0_19 = arith.constant 0 : index
      %30 = vector.load %arg8[%c0_18, %c0_19] : memref<8x32xf32, #tpu.memory_space<vmem>>, vector<8x32xf32>
      tpu.vector_store %arg8[%c0_18, %c0_19], %29 {strides = array<i32>} : memref<8x32xf32, #tpu.memory_space<vmem>>, vector<8x32xf32>,
    } else {
    }
    return
  }
  func.func @transform_0(%arg0: i32, %arg1: i32, %arg2: i32) -> (i32, i32) {
    %c0_i32 = arith.constant 0 : i32
    return %arg0, %arg2 : i32, i32
  }
  func.func @transform_1(%arg0: i32, %arg1: i32, %arg2: i32) -> (i32, i32) {
    %c0_i32 = arith.constant 0 : i32
    return %arg1, %arg2 : i32, i32
  }
  func.func @transform_2(%arg0: i32, %arg1: i32, %arg2: i32) -> (i32, i32) {
    %c0_i32 = arith.constant 0 : i32
    %c0_i32_0 = arith.constant 0 : i32
    return %c0_i32, %arg1 : i32, i32
  }
  func.func @transform_3(%arg0: i32, %arg1: i32, %arg2: i32) -> (i32, i32) {
    %c0_i32 = arith.constant 0 : i32
    %c0_i32_0 = arith.constant 0 : i32
    return %arg0, %c0_i32 : i32, i32
  }
  func.func @transform_4(%arg0: i32, %arg1: i32, %arg2: i32) -> (i32, i32) {
    %c0_i32 = arith.constant 0 : i32
    %c0_i32_0 = arith.constant 0 : i32
    return %c0_i32, %arg1 : i32, i32
  }
  func.func @transform_5(%arg0: i32, %arg1: i32, %arg2: i32) -> (i32, i32) {
    %c0_i32 = arith.constant 0 : i32
    return %arg0, %arg1 : i32, i32
  }
}

</mosaic_0001>

<llo_original>
// kernel: tpu_custom_call.1
$region0: #{tpu_custom_call.1}
  #allocation0 [shape = 'u32[]', space=smem, size = 0x4, offset = 0x4, fixed_abs, tag = 'smem constant byte address 0x4 - core index']
  #allocation1 [shape = 'u32[72,128]{1,0:T(1,128)}', space=vmem, size = 0x9000, scoped, tag = 'internal scratch']
  #allocation2 [shape = 'f32[8,32]{1,0:T(8,128)}', space=vmem, size = 0x1000, scoped, tag = 'scratch operand']
  %s0 = inlined_call_operand.vmem [shape: f32[8,32], index: 0, kind: input, shape index: {}]
  %s1 = inlined_call_operand.hbm [shape: f32[32,32], index: 1, kind: input, shape index: {}]
  %s2 = inlined_call_operand.hbm [shape: f32[1,32], index: 2, kind: input, shape index: {}]
  %s3 = inlined_call_operand.vmem [shape: f32[8,2], index: 3, kind: input, shape index: {}]
  %s4 = inlined_call_operand.vmem [shape: f32[2,32], index: 4, kind: input, shape index: {}]
  %s5 = inlined_call_operand.hbm [shape: f32[8,32], index: 5, kind: output, shape index: {}]
  %s6 = sld [smem:[#allocation0]]
  $region46: #{tpu_custom_call.1} parent=0
    _
  %s8 = ssub.s32 1, %s6
  %s9 = scalar_select 0, %s8, %s6
  $region1: #{tpu_custom_call.1} parent=0
    #allocation3 [shape = 'u8[16384]{0}', space=vmem, size = 0x4000, scoped, tag = 'input window, operand 1, single buffered']
    #allocation4 [shape = 's32[1]{0}', space=sflag, size = 0x4, scoped, tag = 'scoped memory for tpu_custom_call.1']
    #allocation5 [shape = 's32[1]{0}', space=sflag, size = 0x4, scoped, tag = 'scoped memory for tpu_custom_call.1']
    #allocation6 [shape = 'u8[512]{0}', space=vmem, size = 0x400, scoped, tag = 'input window, operand 2, single buffered']
    #allocation7 [shape = 's32[1]{0}', space=sflag, size = 0x4, scoped, tag = 'scoped memory for tpu_custom_call.1']
    #allocation8 [shape = 'u8[4096]{0}', space=vmem, size = 0x1000, scoped, tag = 'output window, operand 0, single buffered']
    %10 = vsyncpa [#allocation4], 0
    %11 = vsyncpa [#allocation7], 0
    %12 = vsyncpa [#allocation5], 0
    // Predicated region
    $region2: #{tpu_custom_call.1} parent=1 // pred_check
      _
    $region3: #{tpu_custom_call.1} parent=1 // pred_check_branch
      %14 = sbr.rel (0) target = $region5
    $region4: #{tpu_custom_call.1} parent=1 // pred_region
      _
    $region5: #{tpu_custom_call.1} parent=1 // pred_fallthru
      _
    // Predicated region
    $region6: #{tpu_custom_call.1} parent=1 // pred_check
      _
    $region7: #{tpu_custom_call.1} parent=1 // pred_check_branch
      %16 = sbr.rel (0) target = $region9
    $region8: #{tpu_custom_call.1} parent=1 // pred_region
      %18 = vsyncadd [#allocation4], 0
      %s19 = sshll.u32 %s1, 4
      %s20 = int_to_ptr.hbm [resolvable:$true] %s19
      %s21 = sshll.u32 [#allocation3], 4
      %s22 = int_to_ptr.vmem [resolvable:$true] %s21
      %27 = dma.hbm_to_vmem [thread:$0]  %s20, 512, %s22, [#allocation4], 128, 128, 8
    $region9: #{tpu_custom_call.1} parent=1 // pred_fallthru
      _
    // Predicated region
    $region10: #{tpu_custom_call.1} parent=1 // pred_check
      _
    $region11: #{tpu_custom_call.1} parent=1 // pred_check_branch
      %29 = sbr.rel (0) target = $region13
    $region12: #{tpu_custom_call.1} parent=1 // pred_region
      %31 = vsyncadd [#allocation7], 0
      %s33 = sshll.u32 %s2, 4
      %s34 = int_to_ptr.hbm [resolvable:$true] %s33
      %s35 = sshll.u32 [#allocation6], 4
      %s36 = int_to_ptr.vmem [resolvable:$true] %s35
      %38 = dma.hbm_to_vmem [thread:$0]  %s34, 16, %s36, [#allocation7]
    $region13: #{tpu_custom_call.1} parent=1 // pred_fallthru
      _
    // Predicated region
    $region14: #{tpu_custom_call.1} parent=1 // pred_check
      _
    $region15: #{tpu_custom_call.1} parent=1 // pred_check_branch
      %40 = sbr.rel (0) target = $region17
    $region16: #{tpu_custom_call.1} parent=1 // pred_region
      _
    $region17: #{tpu_custom_call.1} parent=1 // pred_fallthru
      _
    // Predicated region
    $region18: #{tpu_custom_call.1} parent=1 // pred_check
      _
    $region19: #{tpu_custom_call.1} parent=1 // pred_check_branch
      %42 = sbr.rel (0) target = $region21
    $region20: #{tpu_custom_call.1} parent=1 // pred_region
      _
    $region21: #{tpu_custom_call.1} parent=1 // pred_fallthru
      _
    // Predicated region
    $region22: #{tpu_custom_call.1} parent=1 // pred_check
      _
    $region23: #{tpu_custom_call.1} parent=1 // pred_check_branch
      %44 = sbr.rel (0) target = $region25
    $region24: #{tpu_custom_call.1} parent=1 // pred_region
      %46 = dma.done [#allocation4], 512
    $region25: #{tpu_custom_call.1} parent=1 // pred_fallthru
      _
    // Predicated region
    $region26: #{tpu_custom_call.1} parent=1 // pred_check
      _
    $region27: #{tpu_custom_call.1} parent=1 // pred_check_branch
      %48 = sbr.rel (0) target = $region29
    $region28: #{tpu_custom_call.1} parent=1 // pred_region
      %50 = dma.done [#allocation7], 16
    $region29: #{tpu_custom_call.1} parent=1 // pred_fallthru
      _
    %p51 = scmp.eq.s32.totalorder 0, 0
    // Predicated region
    $region30: #{tpu_custom_call.1} parent=1 // pred_check
      %p52 = pneg %p51
    $region31: #{tpu_custom_call.1} parent=1 // pred_check_branch
      %54 = sbr.rel (%p52) target = $region33
    $region32: #{tpu_custom_call.1} parent=1 // pred_region
      %vm55 = vcmask 261120
      %56 = vst.msk [vmem:[#allocation2] sm:$0xff] %vm55, 0.0
    $region33: #{tpu_custom_call.1} parent=1 // pred_fallthru
      _
    %v57 = vld [vmem:[#allocation2] sm:$0xff]
    %v58 = vld [vmem:[%s0] sm:$0xff]
    %v59 = vld [vmem:[#allocation3] sm:$0xff]
    %v60 = vld [vmem:[#allocation3 + $0x8] sm:$0xff]
    %v61 = vld [vmem:[#allocation3 + $0x10] sm:$0xff]
    %v62 = vld [vmem:[#allocation3 + $0x18] sm:$0xff]
    %vm63 = vcmask 261120
    %v65 = vsel %vm63, %v58, 0
    %v68 = vsel %vm63, %v59, 0
    %v71 = vsel %vm63, %v60, 0
    %v74 = vsel %vm63, %v61, 0
    %v77 = vsel %vm63, %v62, 0
    %79 = vmatpush.xpose.msra.mxu0 0.0
    %80 = vmatpush.xpose.msra.mxu0 0.0
    %81 = vmatpush.xpose.msra.mxu0 0.0
    %82 = vmatpush.xpose.msra.mxu0 0.0
    %83 = vmatpush.xpose.msra.mxu0 0.0
    %84 = vmatpush.xpose.msra.mxu0 0.0
    %85 = vmatpush.xpose.msra.mxu0 0.0
    %86 = vmatpush.xpose.msra.mxu0 0.0
    %87 = vmatpush.xpose.msra.mxu0 0.0
    %88 = vmatpush.xpose.msra.mxu0 0.0
    %89 = vmatpush.xpose.msra.mxu0 0.0
    %90 = vmatpush.xpose.msra.mxu0 0.0
    %91 = vmatpush.xpose.msra.mxu0 %v77
    %92 = vmatpush.xpose.msra.mxu0 %v74
    %93 = vmatpush.xpose.msra.mxu0 %v71
    %94 = vmatpush.xpose.msra.mxu0 %v68
    %95 = vmatmul.f32.gmra.mxu0 %v65
    %v96 = vpop.f32.mrf.mxu0
    %v97 = vadd.f32 0.0, %v96
    %98 = vdwg.mxu0
    %v99 = vadd.f32 %v57, %v97
    %100 = vst.msk [vmem:[#allocation2] sm:$0xff] %vm63, %v99
    // Predicated region
    $region34: #{tpu_custom_call.1} parent=1 // pred_check
      %p101 = pneg %p51
    $region35: #{tpu_custom_call.1} parent=1 // pred_check_branch
      %103 = sbr.rel (%p101) target = $region37
    $region36: #{tpu_custom_call.1} parent=1 // pred_region
      %v104 = vld [vmem:[#allocation2] sm:$0xff]
      %v105 = vld [vmem:[#allocation6] sm:$0x1]
      %v107 = vperm.slane %v105, 0
      %v109 = vadd.f32 %v104, %v107
      %v110 = vld [vmem:[%s3] sm:$0xff]
      %v111 = vld [vmem:[%s4] sm:$0x3]
      %113 = vset.pattern.permute.xlu0 0
      %114 = vperm.xlu0 %113, %v110
      %v115 = vpop.permute.xlu0 %114
      %v117 = vperm.slane %v111, 0
      %v118 = vmul.f32 %v115, %v117
      %v119 = vadd.f32 %v109, %v118
      %120 = vset.pattern.permute.xlu0 1
      %121 = vperm.xlu0 %120, %v110
      %v122 = vpop.permute.xlu0 %121
      %v124 = vperm.slane %v111, 1
      %v125 = vmul.f32 %v122, %v124
      %v126 = vadd.f32 %v119, %v125
      %127 = vst.msk [vmem:[#allocation8] sm:$0xff] %vm63, %v126
    $region37: #{tpu_custom_call.1} parent=1 // pred_fallthru
      _
    // Predicated region
    $region38: #{tpu_custom_call.1} parent=1 // pred_check
      _
    $region39: #{tpu_custom_call.1} parent=1 // pred_check_branch
      %129 = sbr.rel (0) target = $region41
    $region40: #{tpu_custom_call.1} parent=1 // pred_region
      %131 = vsyncadd [#allocation5], 0
      %s133 = sshll.u32 [#allocation8], 4
      %s134 = int_to_ptr.vmem [resolvable:$true] %s133
      %s135 = sshll.u32 %s5, 4
      %s136 = int_to_ptr.hbm [resolvable:$true] %s135
      %138 = dma.vmem_to_hbm [thread:$0]  %s134, 128, %s136, [#allocation5]
    $region41: #{tpu_custom_call.1} parent=1 // pred_fallthru
      _
    // Predicated region
    $region42: #{tpu_custom_call.1} parent=1 // pred_check
      _
    $region43: #{tpu_custom_call.1} parent=1 // pred_check_branch
      %140 = sbr.rel (0) target = $region45
    $region44: #{tpu_custom_call.1} parent=1 // pred_region
      %142 = dma.done [#allocation5], 128
    $region45: #{tpu_custom_call.1} parent=1 // pred_fallthru
      _
    %143 = vsyncpa [#allocation4], 1
    %144 = vsyncpa [#allocation7], 1
    %145 = vsyncpa [#allocation5], 1

</llo_original>
